<compile_context>
chip_gen: v5e
topology: v5e:2x2
jax: 0.10.0
libtpu: 0.0.40
codegen_flags: <defaults>
</compile_context>

<pallas_src>
import functools

import jax
import jax.numpy as jnp
from jax.experimental import pallas as pl
from jax.experimental.pallas import tpu as pltpu

LANE = 128


def _rup(n, m=LANE):
    return ((n + m - 1) // m) * m


def _pad2(a, rows, cols):
    return jnp.pad(a, ((0, rows - a.shape[0]), (0, cols - a.shape[1])))


@functools.lru_cache(maxsize=None)
def _vmem_limit_bytes():
    """Per-generation scoped-VMEM limit: 75% of physical, capped [32 MiB, 96 MiB]."""
    try:
        cap = int(pltpu.get_tpu_info().vmem_capacity_bytes)
    except Exception:
        cap = 64 * 1024 * 1024  # conservative (v7x physical)
    return max(32 * 1024 * 1024, min(cap * 3 // 4, 96 * 1024 * 1024))


def _pick_row_tile(n_pad):
    # Biggest tile <= 512 that still leaves >= 2 row blocks (v7x megacore needs
    # >= 2 blocks on the "parallel" axis); fall back to a single 128 block.
    for t in (512, 256, 128):
        if n_pad % t == 0 and n_pad // t >= 2:
            return t
    return 128


def _pick_k_tile(n_pad):
    for t in (2048, 1024, 512, 256, 128):
        if n_pad % t == 0:
            return t
    return 128


# ----------------------------- Pallas kernels ------------------------------

def xw_kernel(x_ref, w_ref, o_ref):
    """First layer's XW = X @ W, row-tiled, bf16 output (one-time tiny kernel)."""
    o_ref[...] = jnp.dot(x_ref[...], w_ref[...],
                         preferred_element_type=jnp.float32).astype(jnp.bfloat16)


def _finalize_gcn(acc, b_ref, emb_normalize):
    """bias + (optional) L2 row-normalize + ReLU, all on the in-vreg accumulator."""
    y = acc + b_ref[...]
    if emb_normalize:
        # F.normalize(p=2, dim=-1): x * rsqrt(max(||x||^2, 1e-24)); padded lanes are 0.
        sumsq = jnp.sum(y * y, axis=-1, keepdims=True)
        y = y * jax.lax.rsqrt(jnp.maximum(sumsq, 1e-24))
    return jnp.maximum(y, 0.0)  # ReLU


def gcn_mid_kernel(a_ref, xw_ref, b_ref, wn_ref, o_ref, acc_ref, *, tk, emb_normalize):
    """Non-last GCN layer: acc += A[i,k] @ XW[k]; finalize fuses bias/norm/ReLU and
    the NEXT layer's X@W (h @ W_next), emitting bf16 XW_next directly."""
    k = pl.program_id(1)

    @pl.when(k == 0)
    def _():
        acc_ref[...] = jnp.zeros_like(acc_ref)

    off = pl.multiple_of(k * tk, tk)
    acc_ref[...] += jnp.dot(a_ref[...], xw_ref[pl.ds(off, tk), :],
                            preferred_element_type=jnp.float32)

    @pl.when(k == pl.num_programs(1) - 1)
    def _():
        h = _finalize_gcn(acc_ref[...], b_ref, emb_normalize).astype(jnp.bfloat16)
        o_ref[...] = jnp.dot(h, wn_ref[...],
                             preferred_element_type=jnp.float32).astype(jnp.bfloat16)


def gcn_last_kernel(*refs, tk, emb_normalize, n_hidden, out_dim):
    """Last GCN layer + fused MLP head.
    refs = (a, xw, b, [w_h, b_h]*n_hidden, w_o, b_o, emb, logits, probs, acc)."""
    a_ref, xw_ref, b_ref = refs[0], refs[1], refs[2]
    idx = 3
    hidden = []
    for _ in range(n_hidden):
        hidden.append((refs[idx], refs[idx + 1]))
        idx += 2
    wo_ref, bo_ref = refs[idx], refs[idx + 1]
    idx += 2
    emb_ref, logits_ref, probs_ref = refs[idx], refs[idx + 1], refs[idx + 2]
    acc_ref = refs[idx + 3]

    k = pl.program_id(1)

    @pl.when(k == 0)
    def _():
        acc_ref[...] = jnp.zeros_like(acc_ref)

    off = pl.multiple_of(k * tk, tk)
    acc_ref[...] += jnp.dot(a_ref[...], xw_ref[pl.ds(off, tk), :],
                            preferred_element_type=jnp.float32)

    @pl.when(k == pl.num_programs(1) - 1)
    def _():
        y = _finalize_gcn(acc_ref[...], b_ref, emb_normalize)
        emb_ref[...] = y

        # MLP head on the in-VMEM activation: (Linear + ELU)*n_hidden -> Linear.
        h = y
        for (wh_ref, bh_ref) in hidden:
            h = jnp.dot(h.astype(jnp.bfloat16), wh_ref[...],
                        preferred_element_type=jnp.float32) + bh_ref[...]
            # ELU(alpha=1); clamp the untaken branch so expm1 never sees large +x.
            h = jnp.where(h > 0.0, h, jnp.expm1(jnp.minimum(h, 0.0)))
            # TODO(synk): dropout is eval-mode identity (no RNG mask in inference path).
        logits = jnp.dot(h.astype(jnp.bfloat16), wo_ref[...],
                         preferred_element_type=jnp.float32) + bo_ref[...]
        logits_ref[...] = logits

        # Softmax over the REAL class columns only (lane padding masked out).
        col = jax.lax.broadcasted_iota(jnp.int32, logits.shape, 1)
        valid = col < out_dim
        masked = jnp.where(valid, logits, -1e30)
        m = jnp.max(masked, axis=-1, keepdims=True)
        e = jnp.where(valid, jnp.exp(masked - m), 0.0)
        probs_ref[...] = e / jnp.sum(e, axis=-1, keepdims=True)


# ------------------------------- wrappers ----------------------------------

def compute_xw(x_pad, w):
    """x_pad: (Np, Fi) bf16, w: (Fi, Fo) bf16 -> (Np, Fo) bf16."""
    n_pad, f_in = x_pad.shape
    f_out = w.shape[1]
    tm = _pick_row_tile(n_pad)
    return pl.pallas_call(
        xw_kernel,
        out_shape=jax.ShapeDtypeStruct((n_pad, f_out), jnp.bfloat16),
        grid=(n_pad // tm,),
        in_specs=[pl.BlockSpec((tm, f_in), lambda i: (i, 0)),
                  pl.BlockSpec((f_in, f_out), lambda i: (0, 0))],
        out_specs=pl.BlockSpec((tm, f_out), lambda i: (i, 0)),
        compiler_params=pltpu.CompilerParams(
            dimension_semantics=("parallel",),
            vmem_limit_bytes=_vmem_limit_bytes()),
    )(x_pad, w)


def gcn_mid_layer(a_pad, xw_pad, b_pad, w_next, *, emb_normalize):
    """a_pad: (Np,Np) bf16, xw_pad: (Np,Fo) bf16 (resident), b_pad: (1,Fo) f32,
    w_next: (Fo,Fn) bf16 -> XW_next (Np,Fn) bf16."""
    n_pad = a_pad.shape[0]
    f_out = xw_pad.shape[1]
    f_next = w_next.shape[1]
    tm = _pick_row_tile(n_pad)
    tk = _pick_k_tile(n_pad)
    grid = (n_pad // tm, n_pad // tk)

    return pl.pallas_call(
        functools.partial(gcn_mid_kernel, tk=tk, emb_normalize=emb_normalize),
        out_shape=jax.ShapeDtypeStruct((n_pad, f_next), jnp.bfloat16),
        grid_spec=pltpu.PrefetchScalarGridSpec(
            num_scalar_prefetch=0,
            grid=grid,
            in_specs=[
                pl.BlockSpec((tm, tk), lambda i, k: (i, k)),         # A tile (HBM stream)
                pl.BlockSpec((n_pad, f_out), lambda i, k: (0, 0)),   # XW resident (1 DMA)
                pl.BlockSpec((1, f_out), lambda i, k: (0, 0)),       # bias resident
                pl.BlockSpec((f_out, f_next), lambda i, k: (0, 0)),  # next-layer W resident
            ],
            out_specs=pl.BlockSpec((tm, f_next), lambda i, k: (i, 0)),
            scratch_shapes=[pltpu.VMEM((tm, f_out), jnp.float32)],
        ),
        compiler_params=pltpu.CompilerParams(
            dimension_semantics=("parallel", "arbitrary"),
            vmem_limit_bytes=_vmem_limit_bytes()),
    )(a_pad, xw_pad, b_pad, w_next)


def gcn_last_layer(a_pad, xw_pad, b_pad, hidden_params, out_params, *,
                   emb_normalize, out_dim):
    """Last GCN layer + fused MLP head -> (emb f32, logits f32, probs f32), padded."""
    n_pad = a_pad.shape[0]
    f_out = xw_pad.shape[1]
    w_o, b_o = out_params
    c_pad = w_o.shape[1]
    tm = _pick_row_tile(n_pad)
    tk = _pick_k_tile(n_pad)
    grid = (n_pad // tm, n_pad // tk)

    in_specs = [
        pl.BlockSpec((tm, tk), lambda i, k: (i, k)),
        pl.BlockSpec((n_pad, f_out), lambda i, k: (0, 0)),
        pl.BlockSpec((1, f_out), lambda i, k: (0, 0)),
    ]
    args = [a_pad, xw_pad, b_pad]
    for w, b in hidden_params:
        in_specs.append(pl.BlockSpec(w.shape, lambda i, k: (0, 0)))
        in_specs.append(pl.BlockSpec(b.shape, lambda i, k: (0, 0)))
        args.extend([w, b])
    in_specs.append(pl.BlockSpec(w_o.shape, lambda i, k: (0, 0)))
    in_specs.append(pl.BlockSpec(b_o.shape, lambda i, k: (0, 0)))
    args.extend([w_o, b_o])

    return pl.pallas_call(
        functools.partial(gcn_last_kernel, tk=tk, emb_normalize=emb_normalize,
                          n_hidden=len(hidden_params), out_dim=out_dim),
        out_shape=(jax.ShapeDtypeStruct((n_pad, f_out), jnp.float32),   # emb
                   jax.ShapeDtypeStruct((n_pad, c_pad), jnp.float32),   # logits
                   jax.ShapeDtypeStruct((n_pad, c_pad), jnp.float32)),  # probs
        grid_spec=pltpu.PrefetchScalarGridSpec(
            num_scalar_prefetch=0,
            grid=grid,
            in_specs=in_specs,
            out_specs=(pl.BlockSpec((tm, f_out), lambda i, k: (i, 0)),
                       pl.BlockSpec((tm, c_pad), lambda i, k: (i, 0)),
                       pl.BlockSpec((tm, c_pad), lambda i, k: (i, 0))),
            scratch_shapes=[pltpu.VMEM((tm, f_out), jnp.float32)],
        ),
        compiler_params=pltpu.CompilerParams(
            dimension_semantics=("parallel", "arbitrary"),
            vmem_limit_bytes=_vmem_limit_bytes()),
    )(*args)


# ------------------------------ model glue ---------------------------------

def build_normalized_adjacency(edge_index, num_nodes, n_pad):
    """Dense PyG gcn_norm equivalent, built directly at the padded (Np,Np) size
    and cast to bf16 once: A_hat = A + I (real nodes only), A_norm = D^-1/2 A_hat D^-1/2.
    Padded rows/cols have zero degree -> all-zero rows/cols.
    NOTE: duplicate edges collapse to weight 1 and the edge list is symmetrized
    (matches a clean undirected, de-duplicated edge list)."""
    src, dst = edge_index[0], edge_index[1]
    a = jnp.zeros((n_pad, n_pad), jnp.float32).at[dst, src].set(1.0)
    a = jnp.maximum(a, a.T)
    real = (jnp.arange(n_pad) < num_nodes).astype(jnp.float32)
    a_hat = a + jnp.diag(real)
    deg = jnp.sum(a_hat, axis=1)
    dinv = jnp.where(deg > 0.0, jax.lax.rsqrt(deg), 0.0)
    return (dinv[:, None] * a_hat * dinv[None, :]).astype(jnp.bfloat16)


def glorot(key, shape):
    limit = jnp.sqrt(6.0 / (shape[0] + shape[1]))
    return jax.random.uniform(key, shape, jnp.float32, -limit, limit)


def init_params(key, input_dim, latent_dim, mlp_hidden, output_dim, concate):
    """Glorot weights at real dims, zero biases; padded to 128-lane multiples,
    weights cast to bf16 (MXU-native), biases kept f32."""
    keys = jax.random.split(key, len(latent_dim) + len(mlp_hidden) + 1)
    ki = 0

    gnn = []
    fin = input_dim
    for fout in latent_dim:
        w = glorot(keys[ki], (fin, fout)); ki += 1
        gnn.append((_pad2(w, _rup(fin), _rup(fout)).astype(jnp.bfloat16),
                    jnp.zeros((1, _rup(fout)), jnp.float32)))
        fin = fout

    mlp_input_dim = latent_dim[-1] * len(latent_dim) if concate else latent_dim[-1]
    hidden = []
    fin = mlp_input_dim
    for fout in mlp_hidden:
        w = glorot(keys[ki], (fin, fout)); ki += 1
        hidden.append((_pad2(w, _rup(fin), _rup(fout)).astype(jnp.bfloat16),
                       jnp.zeros((1, _rup(fout)), jnp.float32)))
        fin = fout

    w = glorot(keys[ki], (fin, output_dim)); ki += 1
    mlp_out = (_pad2(w, _rup(fin), _rup(output_dim)).astype(jnp.bfloat16),
               jnp.zeros((1, _rup(output_dim)), jnp.float32))
    return {"gnn": gnn, "mlp_hidden": hidden, "mlp_out": mlp_out}


def gcnnet_nc_forward(x, a_pad, params, *, emb_normlize, concate, latent_dim, output_dim):
    if concate:
        # TODO(synk): concate=True (per-layer embedding concat) not implemented in the
        # fused pipeline; chosen model_args use concate=False.
        raise NotImplementedError("concate=True not supported by the fused kernels")

    n, f_in = x.shape
    n_pad = a_pad.shape[0]
    x_pad = _pad2(x, n_pad, _rup(f_in)).astype(jnp.bfloat16)

    # X @ W_0 once (tiny, bf16).
    xw = compute_xw(x_pad, params["gnn"][0][0])

    # Non-last GCN layers: aggregation + fused "next-layer XW" in the finalize.
    num_layers = len(params["gnn"])
    for l in range(num_layers - 1):
        xw = gcn_mid_layer(a_pad, xw, params["gnn"][l][1], params["gnn"][l + 1][0],
                           emb_normalize=emb_normlize)

    # Last GCN layer with the MLP head fused into its finalize.
    emb_pad, logits_pad, probs_pad = gcn_last_layer(
        a_pad, xw, params["gnn"][-1][1], params["mlp_hidden"], params["mlp_out"],
        emb_normalize=emb_normlize, out_dim=output_dim)

    return (logits_pad[:n, :output_dim],
            probs_pad[:n, :output_dim],
            emb_pad[:n, :latent_dim[-1]])


# --------------------------------- main -------------------------------------

if __name__ == "__main__":
    key = jax.random.PRNGKey(0)
    k_src, k_dst, k_x, k_p = jax.random.split(key, 4)

    # Small synthetic node-classification graph.
    num_nodes = 16
    input_dim = 8
    output_dim = 4
    latent_dim = [32, 32]
    mlp_hidden = [32]
    concate = False
    emb_normlize = True
    num_edges = 40

    src = jax.random.randint(k_src, (num_edges,), 0, num_nodes)
    dst = jax.random.randint(k_dst, (num_edges,), 0, num_nodes)
    edge_index = jnp.stack([src, dst], axis=0)  # (2, E)
    x = jax.random.normal(k_x, (num_nodes, input_dim), jnp.float32)

    n_pad = _rup(num_nodes)
    a_pad = build_normalized_adjacency(edge_index, num_nodes, n_pad)  # (Np,Np) bf16
    params = init_params(k_p, input_dim, latent_dim, mlp_hidden, output_dim, concate)

    logits, probs, emb = gcnnet_nc_forward(
        x, a_pad, params,
        emb_normlize=emb_normlize, concate=concate,
        latent_dim=latent_dim, output_dim=output_dim)
    jax.block_until_ready((logits, probs, emb))

    assert logits.shape == (num_nodes, output_dim)
    assert probs.shape == (num_nodes, output_dim)
    assert emb.shape == (num_nodes, latent_dim[-1])
    assert bool(jnp.all(jnp.isfinite(logits)))
    assert bool(jnp.all(jnp.isfinite(probs)))
    assert bool(jnp.all(jnp.abs(jnp.sum(probs, axis=-1) - 1.0) < 1e-3))
    print("KERNEL_OK")
</pallas_src>

<mosaic_0001>
module attributes {stable_mosaic.version = 11 : i64} {
  func.func @xw_kernel(%arg0: i32, %arg1: memref<128x128xbf16, #tpu.memory_space<vmem>>, %arg2: memref<128x128xbf16, #tpu.memory_space<vmem>>, %arg3: memref<128x128xbf16, #tpu.memory_space<vmem>>) attributes {dimension_semantics = [#tpu.dimension_semantics<parallel>], iteration_bounds = array<i64: 1>, scalar_prefetch = 0 : i64, scratch_operands = 0 : i64, tpu.core_type = #tpu.core_type<tc>, window_params = [{transform_indices = @transform_0, window_bounds = array<i64: 128, 128>}, {pipeline_mode = #tpu.pipeline_mode<synchronous>, transform_indices = @transform_1, window_bounds = array<i64: 128, 128>}, {transform_indices = @transform_2, window_bounds = array<i64: 128, 128>}]} {
    %c0 = arith.constant 0 : index
    %c0_0 = arith.constant 0 : index
    %0 = vector.load %arg1[%c0, %c0_0] : memref<128x128xbf16, #tpu.memory_space<vmem>>, vector<128x128xbf16>
    %c0_1 = arith.constant 0 : index
    %c0_2 = arith.constant 0 : index
    %1 = vector.load %arg2[%c0_1, %c0_2] : memref<128x128xbf16, #tpu.memory_space<vmem>>, vector<128x128xbf16>
    %cst = arith.constant dense<0.000000e+00> : vector<128x128xf32>
    %2 = tpu.matmul %0, %1, %cst {dimension_numbers = #tpu.dot_dimension_numbers<[1], [0], [0], [1], [0, 0, 1, 1], [], []>} : vector<128x128xbf16>, vector<128x128xbf16>, vector<128x128xf32> -> vector<128x128xf32>
    %3 = arith.truncf %2 : vector<128x128xf32> to vector<128x128xbf16>
    %c0_3 = arith.constant 0 : index
    %c0_4 = arith.constant 0 : index
    %4 = vector.load %arg3[%c0_3, %c0_4] : memref<128x128xbf16, #tpu.memory_space<vmem>>, vector<128x128xbf16>
    tpu.vector_store %arg3[%c0_3, %c0_4], %3 {strides = array<i32>} : memref<128x128xbf16, #tpu.memory_space<vmem>>, vector<128x128xbf16>,
    return
  }
  func.func @transform_0(%arg0: i32) -> (i32, i32) {
    %c0_i32 = arith.constant 0 : i32
    %c0_i32_0 = arith.constant 0 : i32
    return %arg0, %c0_i32 : i32, i32
  }
  func.func @transform_1(%arg0: i32) -> (i32, i32) {
    %c0_i32 = arith.constant 0 : i32
    %c0_i32_0 = arith.constant 0 : i32
    %c0_i32_1 = arith.constant 0 : i32
    return %c0_i32, %c0_i32_0 : i32, i32
  }
  func.func @transform_2(%arg0: i32) -> (i32, i32) {
    %c0_i32 = arith.constant 0 : i32
    %c0_i32_0 = arith.constant 0 : i32
    return %arg0, %c0_i32 : i32, i32
  }
}

</mosaic_0001>

<llo_original>
// kernel: tpu_custom_call.1
$region0: #{tpu_custom_call.1}
  #allocation0 [shape = 'u32[]', space=smem, size = 0x4, offset = 0x4, fixed_abs, tag = 'smem constant byte address 0x4 - core index']
  #allocation1 [shape = 'u32[72,128]{1,0:T(1,128)}', space=vmem, size = 0x9000, scoped, tag = 'internal scratch']
  %s0 = inlined_call_operand.hbm [shape: bf16[128,128], index: 0, kind: input, shape index: {}]
  %s1 = inlined_call_operand.hbm [shape: bf16[128,128], index: 1, kind: input, shape index: {}]
  %s2 = inlined_call_operand.hbm [shape: bf16[128,128], index: 2, kind: output, shape index: {}]
  %s3 = sld [smem:[#allocation0]]
  $region26: #{tpu_custom_call.1} parent=0
    _
  %s5 = ssub.s32 1, %s3
  %s6 = scalar_select 0, %s5, %s3
  $region1: #{tpu_custom_call.1} parent=0
    #allocation2 [shape = 'u8[32768]{0}', space=vmem, size = 0x8000, scoped, tag = 'input window, operand 0, single buffered']
    #allocation3 [shape = 's32[1]{0}', space=sflag, size = 0x4, scoped, tag = 'scoped memory for tpu_custom_call.1']
    #allocation4 [shape = 's32[1]{0}', space=sflag, size = 0x4, scoped, tag = 'scoped memory for tpu_custom_call.1']
    #allocation5 [shape = 'u8[32768]{0}', space=vmem, size = 0x8000, scoped, tag = 'input window, operand 1, single buffered']
    #allocation6 [shape = 's32[1]{0}', space=sflag, size = 0x4, scoped, tag = 'scoped memory for tpu_custom_call.1']
    #allocation7 [shape = 'u8[32768]{0}', space=vmem, size = 0x8000, scoped, tag = 'output window, operand 0, single buffered']
    %7 = vsyncpa [#allocation3], 0
    %8 = vsyncpa [#allocation6], 0
    %9 = vsyncpa [#allocation4], 0
    // Predicated region
    $region2: #{tpu_custom_call.1} parent=1 // pred_check
      _
    $region3: #{tpu_custom_call.1} parent=1 // pred_check_branch
      %11 = sbr.rel (0) target = $region5
    $region4: #{tpu_custom_call.1} parent=1 // pred_region
      %13 = vsyncadd [#allocation3], 0
      %s14 = sshll.u32 %s0, 4
      %s15 = int_to_ptr.hbm [resolvable:$true] %s14
      %s16 = sshll.u32 [#allocation2], 4
      %s17 = int_to_ptr.vmem [resolvable:$true] %s16
      %22 = dma.hbm_to_vmem [thread:$0]  %s15, 1024, %s17, [#allocation3], 64, 64, 4
    $region5: #{tpu_custom_call.1} parent=1 // pred_fallthru
      _
    // Predicated region
    $region6: #{tpu_custom_call.1} parent=1 // pred_check
      _
    $region7: #{tpu_custom_call.1} parent=1 // pred_check_branch
      %24 = sbr.rel (0) target = $region9
    $region8: #{tpu_custom_call.1} parent=1 // pred_region
      %26 = vsyncadd [#allocation6], 0
      %s27 = sshll.u32 %s1, 4
      %s28 = int_to_ptr.hbm [resolvable:$true] %s27
      %s29 = sshll.u32 [#allocation5], 4
      %s30 = int_to_ptr.vmem [resolvable:$true] %s29
      %35 = dma.hbm_to_vmem [thread:$0]  %s28, 1024, %s30, [#allocation6], 64, 64, 4
    $region9: #{tpu_custom_call.1} parent=1 // pred_fallthru
      _
    // Predicated region
    $region10: #{tpu_custom_call.1} parent=1 // pred_check
      _
    $region11: #{tpu_custom_call.1} parent=1 // pred_check_branch
      %37 = sbr.rel (0) target = $region13
    $region12: #{tpu_custom_call.1} parent=1 // pred_region
      %39 = dma.done [#allocation3], 1024
    $region13: #{tpu_custom_call.1} parent=1 // pred_fallthru
      _
    // Predicated region
    $region14: #{tpu_custom_call.1} parent=1 // pred_check
      _
    $region15: #{tpu_custom_call.1} parent=1 // pred_check_branch
      %41 = sbr.rel (0) target = $region17
    $region16: #{tpu_custom_call.1} parent=1 // pred_region
      %43 = dma.done [#allocation6], 1024
    $region17: #{tpu_custom_call.1} parent=1 // pred_fallthru
      _
    %v44 = vld [vmem:[#allocation2] sm:$0xf]
    %v45 = vld [vmem:[#allocation2 + $0x4] sm:$0xf]
    %v46 = vld [vmem:[#allocation2 + $0x8] sm:$0xf]
    %v47 = vld [vmem:[#allocation2 + $0xc] sm:$0xf]
    %v48 = vld [vmem:[#allocation2 + $0x10] sm:$0xf]
    %v49 = vld [vmem:[#allocation2 + $0x14] sm:$0xf]
    %v50 = vld [vmem:[#allocation2 + $0x18] sm:$0xf]
    %v51 = vld [vmem:[#allocation2 + $0x1c] sm:$0xf]
    %v52 = vld [vmem:[#allocation2 + $0x20] sm:$0xf]
    %v53 = vld [vmem:[#allocation2 + $0x24] sm:$0xf]
    %v54 = vld [vmem:[#allocation2 + $0x28] sm:$0xf]
    %v55 = vld [vmem:[#allocation2 + $0x2c] sm:$0xf]
    %v56 = vld [vmem:[#allocation2 + $0x30] sm:$0xf]
    %v57 = vld [vmem:[#allocation2 + $0x34] sm:$0xf]
    %v58 = vld [vmem:[#allocation2 + $0x38] sm:$0xf]
    %v59 = vld [vmem:[#allocation2 + $0x3c] sm:$0xf]
    %v60 = vld [vmem:[#allocation5] sm:$0xf]
    %v61 = vld [vmem:[#allocation5 + $0x4] sm:$0xf]
    %v62 = vld [vmem:[#allocation5 + $0x8] sm:$0xf]
    %v63 = vld [vmem:[#allocation5 + $0xc] sm:$0xf]
    %v64 = vld [vmem:[#allocation5 + $0x10] sm:$0xf]
    %v65 = vld [vmem:[#allocation5 + $0x14] sm:$0xf]
    %v66 = vld [vmem:[#allocation5 + $0x18] sm:$0xf]
    %v67 = vld [vmem:[#allocation5 + $0x1c] sm:$0xf]
    %v68 = vld [vmem:[#allocation5 + $0x20] sm:$0xf]
    %v69 = vld [vmem:[#allocation5 + $0x24] sm:$0xf]
    %v70 = vld [vmem:[#allocation5 + $0x28] sm:$0xf]
    %v71 = vld [vmem:[#allocation5 + $0x2c] sm:$0xf]
    %v72 = vld [vmem:[#allocation5 + $0x30] sm:$0xf]
    %v73 = vld [vmem:[#allocation5 + $0x34] sm:$0xf]
    %v74 = vld [vmem:[#allocation5 + $0x38] sm:$0xf]
    %v75 = vld [vmem:[#allocation5 + $0x3c] sm:$0xf]
    %v92 = vunpack.c.l.b16 %v44
    %v93 = vunpack.c.l.b16 %v45
    %v94 = vunpack.c.l.b16 %v46
    %v95 = vunpack.c.l.b16 %v47
    %v96 = vunpack.c.l.b16 %v48
    %v97 = vunpack.c.l.b16 %v49
    %v98 = vunpack.c.l.b16 %v50
    %v99 = vunpack.c.l.b16 %v51
    %v100 = vunpack.c.l.b16 %v52
    %v101 = vunpack.c.l.b16 %v53
    %v102 = vunpack.c.l.b16 %v54
    %v103 = vunpack.c.l.b16 %v55
    %v104 = vunpack.c.l.b16 %v56
    %v105 = vunpack.c.l.b16 %v57
    %v106 = vunpack.c.l.b16 %v58
    %v107 = vunpack.c.l.b16 %v59
    %v108 = vpack.c.b16 %v93, %v92
    %v109 = vpack.c.b16 %v95, %v94
    %v110 = vpack.c.b16 %v97, %v96
    %v111 = vpack.c.b16 %v99, %v98
    %v112 = vpack.c.b16 %v101, %v100
    %v113 = vpack.c.b16 %v103, %v102
    %v114 = vpack.c.b16 %v105, %v104
    %v115 = vpack.c.b16 %v107, %v106
    %v140 = vunpack.c.l.b16 %v60
    %v141 = vunpack.c.l.b16 %v61
    %v142 = vunpack.c.l.b16 %v62
    %v143 = vunpack.c.l.b16 %v63
    %v144 = vunpack.c.l.b16 %v64
    %v145 = vunpack.c.l.b16 %v65
    %v146 = vunpack.c.l.b16 %v66
    %v147 = vunpack.c.l.b16 %v67
    %v148 = vunpack.c.l.b16 %v68
    %v149 = vunpack.c.l.b16 %v69
    %v150 = vunpack.c.l.b16 %v70
    %v151 = vunpack.c.l.b16 %v71
    %v152 = vunpack.c.l.b16 %v72
    %v153 = vunpack.c.l.b16 %v73
    %v154 = vunpack.c.l.b16 %v74
    %v155 = vunpack.c.l.b16 %v75
    %v156 = vpack.c.b16 %v141, %v140
    %v157 = vpack.c.b16 %v143, %v142
    %v158 = vpack.c.b16 %v145, %v144
    %v159 = vpack.c.b16 %v147, %v146
    %v160 = vpack.c.b16 %v149, %v148
    %v161 = vpack.c.b16 %v151, %v150
    %v162 = vpack.c.b16 %v153, %v152
    %v163 = vpack.c.b16 %v155, %v154
    %172 = vmatpush.bf16.msra.mxu0 %v163
    %173 = vmatpush.bf16.msra.mxu0 %v162
    %174 = vmatpush.bf16.msra.mxu0 %v161
    %175 = vmatpush.bf16.msra.mxu0 %v160
    %176 = vmatpush.bf16.msra.mxu0 %v159
    %177 = vmatpush.bf16.msra.mxu0 %v158
    %178 = vmatpush.bf16.msra.mxu0 %v157
    %179 = vmatpush.bf16.msra.mxu0 %v156
    %180 = vmatmul.bf16.gmra.mxu0 %v108
    %v181 = vpop.f32.mrf.mxu0
    %v182 = vadd.f32 0.0, %v181
    %v183 = vpop.f32.mrf.mxu0
    %v184 = vadd.f32 0.0, %v183
    %185 = vmatmul.bf16.gmra.mxu0 %v109
    %v186 = vpop.f32.mrf.mxu0
    %v187 = vadd.f32 0.0, %v186
    %v188 = vpop.f32.mrf.mxu0
    %v189 = vadd.f32 0.0, %v188
    %190 = vmatmul.bf16.gmra.mxu0 %v110
    %v191 = vpop.f32.mrf.mxu0
    %v192 = vadd.f32 0.0, %v191
    %v193 = vpop.f32.mrf.mxu0
    %v194 = vadd.f32 0.0, %v193
    %195 = vmatmul.bf16.gmra.mxu0 %v111
    %v196 = vpop.f32.mrf.mxu0
    %v197 = vadd.f32 0.0, %v196
    %v198 = vpop.f32.mrf.mxu0
    %v199 = vadd.f32 0.0, %v198
    %200 = vmatmul.bf16.gmra.mxu0 %v112
    %v201 = vpop.f32.mrf.mxu0
    %v202 = vadd.f32 0.0, %v201
    %v203 = vpop.f32.mrf.mxu0
    %v204 = vadd.f32 0.0, %v203
    %205 = vmatmul.bf16.gmra.mxu0 %v113
    %v206 = vpop.f32.mrf.mxu0
    %v207 = vadd.f32 0.0, %v206
    %v208 = vpop.f32.mrf.mxu0
    %v209 = vadd.f32 0.0, %v208
    %210 = vmatmul.bf16.gmra.mxu0 %v114
    %v211 = vpop.f32.mrf.mxu0
    %v212 = vadd.f32 0.0, %v211
    %v213 = vpop.f32.mrf.mxu0
    %v214 = vadd.f32 0.0, %v213
    %215 = vmatmul.bf16.gmra.mxu0 %v115
    %v216 = vpop.f32.mrf.mxu0
    %v217 = vadd.f32 0.0, %v216
    %v218 = vpop.f32.mrf.mxu0
    %v219 = vadd.f32 0.0, %v218
    %220 = vdwg.mxu0
    %v221 = vpack.c.bf16 %v182, %v182
    %v222 = vpack.c.bf16 %v184, %v184
    %v223 = vpack.c.bf16 %v187, %v187
    %v224 = vpack.c.bf16 %v189, %v189
    %v225 = vpack.c.bf16 %v192, %v192
    %v226 = vpack.c.bf16 %v194, %v194
    %v227 = vpack.c.bf16 %v197, %v197
    %v228 = vpack.c.bf16 %v199, %v199
    %v229 = vpack.c.bf16 %v202, %v202
    %v230 = vpack.c.bf16 %v204, %v204
    %v231 = vpack.c.bf16 %v207, %v207
    %v232 = vpack.c.bf16 %v209, %v209
    %v233 = vpack.c.bf16 %v212, %v212
    %v234 = vpack.c.bf16 %v214, %v214
    %v235 = vpack.c.bf16 %v217, %v217
    %v236 = vpack.c.bf16 %v219, %v219
    %237 = vst [vmem:[#allocation7] sm:$0xf] %v221
    %238 = vst [vmem:[#allocation7 + $0x4] sm:$0xf] %v222
    %239 = vst [vmem:[#allocation7 + $0x8] sm:$0xf] %v223
    %240 = vst [vmem:[#allocation7 + $0xc] sm:$0xf] %v224
    %241 = vst [vmem:[#allocation7 + $0x10] sm:$0xf] %v225
    %242 = vst [vmem:[#allocation7 + $0x14] sm:$0xf] %v226
    %243 = vst [vmem:[#allocation7 + $0x18] sm:$0xf] %v227
    %244 = vst [vmem:[#allocation7 + $0x1c] sm:$0xf] %v228
    %245 = vst [vmem:[#allocation7 + $0x20] sm:$0xf] %v229
    %246 = vst [vmem:[#allocation7 + $0x24] sm:$0xf] %v230
    %247 = vst [vmem:[#allocation7 + $0x28] sm:$0xf] %v231
    %248 = vst [vmem:[#allocation7 + $0x2c] sm:$0xf] %v232
    %249 = vst [vmem:[#allocation7 + $0x30] sm:$0xf] %v233
    %250 = vst [vmem:[#allocation7 + $0x34] sm:$0xf] %v234
    %251 = vst [vmem:[#allocation7 + $0x38] sm:$0xf] %v235
    %252 = vst [vmem:[#allocation7 + $0x3c] sm:$0xf] %v236
    // Predicated region
    $region18: #{tpu_custom_call.1} parent=1 // pred_check
      _
    $region19: #{tpu_custom_call.1} parent=1 // pred_check_branch
      %254 = sbr.rel (0) target = $region21
    $region20: #{tpu_custom_call.1} parent=1 // pred_region
      %256 = vsyncadd [#allocation4], 0
      %s257 = sshll.u32 [#allocation7], 4
      %s258 = int_to_ptr.vmem [resolvable:$true] %s257
      %s259 = sshll.u32 %s2, 4
      %s260 = int_to_ptr.hbm [resolvable:$true] %s259
      %265 = dma.vmem_to_hbm [thread:$0]  %s258, 1024, %s260, [#allocation4], 64, 64, 4
    $region21: #{tpu_custom_call.1} parent=1 // pred_fallthru
      _
    // Predicated region
    $region22: #{tpu_custom_call.1} parent=1 // pred_check
      _
    $region23: #{tpu_custom_call.1} parent=1 // pred_check_branch
      %267 = sbr.rel (0) target = $region25
    $region24: #{tpu_custom_call.1} parent=1 // pred_region
      %269 = dma.done [#allocation4], 1024
    $region25: #{tpu_custom_call.1} parent=1 // pred_fallthru
      _
    %270 = vsyncpa [#allocation3], 1
    %271 = vsyncpa [#allocation6], 1
    %272 = vsyncpa [#allocation4], 1

</llo_original>
